<compile_context>
chip_gen: v6e
topology: v6e:2x2x1
jax: 0.10.0
libtpu: 0.0.40
codegen_flags: <defaults>
</compile_context>

<pallas_src>
import jax
import jax.numpy as jnp
from jax.experimental import pallas as pl
from jax.experimental.pallas import tpu as pltpu

_LANE = 128
_MAX_LANE_TILE = 2048  # keeps the (N, C, tile) x-block small even for big C on v7x


def _reg_pred_head_kernel(x_ref, w_ref, p_ref, o_ref):
    """Fused 1x1-conv + affine + exp for ALL batch elements of one spatial tile.

    x_ref : (N, C, TS)  channels on sublanes, spatial tile on lanes (native dtype)
    w_ref : (4, C)      1x1 conv weight (native dtype)
    p_ref : (4, 2)      f32 packed params: [:,0]=adjust, [:,1]=adjust*conv_bias+bias
    o_ref : (N, 4, TS)  lane-dense output (TS multiple of 128)
    """
    w = w_ref[...]                      # (4, C), native dtype -> MXU handles bf16/f32
    p = p_ref[...]                      # (4, 2), f32
    adjust = p[:, 0:1]                  # (4, 1) broadcast over lanes
    fbias = p[:, 1:2]                   # (4, 1) fused bias

    n_batch = x_ref.shape[0]            # static, tiny -> unrolled Python loop
    for n in range(n_batch):
        # (4, C) @ (C, TS) on the MXU, f32 accumulation.
        acc = jnp.dot(w, x_ref[n], preferred_element_type=jnp.float32)  # (4, TS)
        # f32 epilogue (mul + add + exp), cast only at the store.
        o_ref[n] = jnp.exp(acc * adjust + fbias).astype(o_ref.dtype)


def reg_pred_head_forward(x_nchw, params):
    """x_nchw: (N, C, H, W). Returns (N, 4, H, W) = exp(adjust*conv1x1(x)+bias)."""
    N, C, H, W = x_nchw.shape
    S = H * W

    w2d = params["weight"].reshape(4, C)                      # (4, C, 1, 1) -> (4, C)

    # Fold the biases: exp((y+conv_b)*adj + b) == exp(adj*y + (adj*conv_b + b)).
    adjust = params["adjust"].reshape(()).astype(jnp.float32)
    conv_b = params["conv_bias"].reshape(4).astype(jnp.float32)
    head_b = params["bias"].reshape(4).astype(jnp.float32)
    fused_b = adjust * conv_b + head_b                        # (4,) — 4 scalars, free
    packed = jnp.stack([jnp.broadcast_to(adjust, (4,)), fused_b], axis=1)  # (4, 2) f32

    x3d = x_nchw.reshape(N, C, S)                             # free reshape, no transpose

    # Lane padding: keep stores full unmasked vst even when H*W % 128 != 0.
    s_pad = ((S + _LANE - 1) // _LANE) * _LANE
    if s_pad <= _MAX_LANE_TILE:
        ts = s_pad
    else:
        ts = _MAX_LANE_TILE
        s_pad = ((s_pad + ts - 1) // ts) * ts                 # make tile divide padded S
    if s_pad != S:
        x3d = jnp.pad(x3d, ((0, 0), (0, 0), (0, s_pad - S)))
    num_tiles = s_pad // ts

    itemsize = jnp.dtype(x_nchw.dtype).itemsize
    cost = pl.CostEstimate(
        flops=2 * N * 4 * C * S,
        transcendentals=N * 4 * S,
        bytes_accessed=N * C * S * itemsize + 4 * C * itemsize + N * 4 * S * itemsize,
    )

    out = pl.pallas_call(
        _reg_pred_head_kernel,
        out_shape=jax.ShapeDtypeStruct((N, 4, s_pad), x_nchw.dtype),
        grid=(num_tiles,),                                    # 1 step for small maps
        in_specs=[
            pl.BlockSpec((N, C, ts), lambda s: (0, 0, s)),    # all batches, one S tile
            pl.BlockSpec((4, C), lambda s: (0, 0)),           # full weight
            pl.BlockSpec((4, 2), lambda s: (0, 0)),           # packed params
        ],
        out_specs=pl.BlockSpec((N, 4, ts), lambda s: (0, 0, s)),
        compiler_params=pltpu.CompilerParams(
            dimension_semantics=("arbitrary",),
        ),
        cost_estimate=cost,
    )(x3d, w2d, packed)

    if s_pad != S:
        out = out[:, :, :S]
    return out.reshape(N, 4, H, W)                            # free reshape back to NCHW


def _reference(x_nchw, params):
    """Pure-JAX reference of the PyTorch forward."""
    w = params["weight"].reshape(4, -1)
    y = jnp.einsum("oc,nchw->nohw", w, x_nchw) + params["conv_bias"].reshape(1, 4, 1, 1)
    return jnp.exp(params["adjust"].reshape(()) * y + params["bias"].reshape(1, 4, 1, 1))


if __name__ == "__main__":
    inchannels = 256          # module default
    N, H, W = 2, 16, 16       # small tracking-head feature map

    key = jax.random.PRNGKey(0)
    kx, kw, kb = jax.random.split(key, 3)

    x = jax.random.normal(kx, (N, inchannels, H, W), dtype=jnp.float32)

    bound = 1.0 / (inchannels ** 0.5)     # ~PyTorch Conv2d default init range
    params = {
        "weight": jax.random.uniform(kw, (4, inchannels, 1, 1), jnp.float32, -bound, bound),
        "conv_bias": jax.random.uniform(kb, (4,), jnp.float32, -bound, bound),
        "adjust": 0.1 * jnp.ones((1,), jnp.float32),            # nn.Parameter(0.1*ones(1))
        "bias": 1.0 * jnp.ones((1, 4, 1, 1), jnp.float32),      # nn.Parameter(ones(1,4,1,1))
    }

    out = reg_pred_head_forward(x, params)
    jax.block_until_ready(out)

    ref = _reference(x, params)
    assert out.shape == (N, 4, H, W)
    assert jnp.allclose(out, ref, atol=1e-4, rtol=1e-4), float(jnp.max(jnp.abs(out - ref)))

    print("KERNEL_OK")
</pallas_src>

<mosaic_0001>
module attributes {stable_mosaic.version = 11 : i64} {
  func.func @_reg_pred_head_kernel(%arg0: i32, %arg1: memref<2x256x256xf32, #tpu.memory_space<vmem>>, %arg2: memref<4x256xf32, #tpu.memory_space<vmem>>, %arg3: memref<4x2xf32, #tpu.memory_space<vmem>>, %arg4: memref<2x4x256xf32, #tpu.memory_space<vmem>>) attributes {dimension_semantics = [#tpu.dimension_semantics<arbitrary>], iteration_bounds = array<i64: 1>, scalar_prefetch = 0 : i64, scratch_operands = 0 : i64, tpu.core_type = #tpu.core_type<tc>, window_params = [{transform_indices = @transform_0, window_bounds = array<i64: 2, 256, 256>}, {pipeline_mode = #tpu.pipeline_mode<synchronous>, transform_indices = @transform_1, window_bounds = array<i64: 4, 256>}, {pipeline_mode = #tpu.pipeline_mode<synchronous>, transform_indices = @transform_2, window_bounds = array<i64: 4, 2>}, {transform_indices = @transform_3, window_bounds = array<i64: 2, 4, 256>}]} {
    %c0 = arith.constant 0 : index
    %c0_0 = arith.constant 0 : index
    %0 = vector.load %arg2[%c0, %c0_0] : memref<4x256xf32, #tpu.memory_space<vmem>>, vector<4x256xf32>
    %c0_1 = arith.constant 0 : index
    %c0_2 = arith.constant 0 : index
    %1 = vector.load %arg3[%c0_1, %c0_2] : memref<4x2xf32, #tpu.memory_space<vmem>>, vector<4x2xf32>
    %2 = vector.extract_strided_slice %1 {offsets = [0, 0], sizes = [4, 1], strides = [1, 1]} : vector<4x2xf32> to vector<4x1xf32>
    %3 = vector.extract_strided_slice %1 {offsets = [0, 1], sizes = [4, 1], strides = [1, 1]} : vector<4x2xf32> to vector<4x1xf32>
    %c0_3 = arith.constant 0 : index
    %c0_4 = arith.constant 0 : index
    %c0_5 = arith.constant 0 : index
    %4 = vector.load %arg1[%c0_3, %c0_4, %c0_5] : memref<2x256x256xf32, #tpu.memory_space<vmem>>, vector<1x256x256xf32>
    %5 = vector.shape_cast %4 : vector<1x256x256xf32> to vector<256x256xf32>
    %cst = arith.constant dense<0.000000e+00> : vector<4x256xf32>
    %6 = tpu.matmul %0, %5, %cst {dimension_numbers = #tpu.dot_dimension_numbers<[1], [0], [0], [1], [0, 0, 1, 1], [], []>} : vector<4x256xf32>, vector<256x256xf32>, vector<4x256xf32> -> vector<4x256xf32>
    %7 = vector.broadcast %2 : vector<4x1xf32> to vector<4x256xf32>
    %8 = arith.mulf %6, %7 : vector<4x256xf32>
    %9 = vector.broadcast %3 : vector<4x1xf32> to vector<4x256xf32>
    %10 = arith.addf %8, %9 : vector<4x256xf32>
    %11 = math.exp %10 : vector<4x256xf32>
    %c0_6 = arith.constant 0 : index
    %c0_7 = arith.constant 0 : index
    %c0_8 = arith.constant 0 : index
    %12 = vector.load %arg4[%c0_6, %c0_7, %c0_8] : memref<2x4x256xf32, #tpu.memory_space<vmem>>, vector<1x4x256xf32>
    %13 = vector.shape_cast %12 : vector<1x4x256xf32> to vector<4x256xf32>
    %14 = vector.shape_cast %11 : vector<4x256xf32> to vector<1x4x256xf32>
    tpu.vector_store %arg4[%c0_6, %c0_7, %c0_8], %14 {strides = array<i32>} : memref<2x4x256xf32, #tpu.memory_space<vmem>>, vector<1x4x256xf32>,
    %c1 = arith.constant 1 : index
    %c0_9 = arith.constant 0 : index
    %c0_10 = arith.constant 0 : index
    %15 = vector.load %arg1[%c1, %c0_9, %c0_10] : memref<2x256x256xf32, #tpu.memory_space<vmem>>, vector<1x256x256xf32>
    %16 = vector.shape_cast %15 : vector<1x256x256xf32> to vector<256x256xf32>
    %cst_11 = arith.constant dense<0.000000e+00> : vector<4x256xf32>
    %17 = tpu.matmul %0, %16, %cst_11 {dimension_numbers = #tpu.dot_dimension_numbers<[1], [0], [0], [1], [0, 0, 1, 1], [], []>} : vector<4x256xf32>, vector<256x256xf32>, vector<4x256xf32> -> vector<4x256xf32>
    %18 = vector.broadcast %2 : vector<4x1xf32> to vector<4x256xf32>
    %19 = arith.mulf %17, %18 : vector<4x256xf32>
    %20 = vector.broadcast %3 : vector<4x1xf32> to vector<4x256xf32>
    %21 = arith.addf %19, %20 : vector<4x256xf32>
    %22 = math.exp %21 : vector<4x256xf32>
    %c1_12 = arith.constant 1 : index
    %c0_13 = arith.constant 0 : index
    %c0_14 = arith.constant 0 : index
    %23 = vector.load %arg4[%c1_12, %c0_13, %c0_14] : memref<2x4x256xf32, #tpu.memory_space<vmem>>, vector<1x4x256xf32>
    %24 = vector.shape_cast %23 : vector<1x4x256xf32> to vector<4x256xf32>
    %25 = vector.shape_cast %22 : vector<4x256xf32> to vector<1x4x256xf32>
    tpu.vector_store %arg4[%c1_12, %c0_13, %c0_14], %25 {strides = array<i32>} : memref<2x4x256xf32, #tpu.memory_space<vmem>>, vector<1x4x256xf32>,
    return
  }
  func.func @transform_0(%arg0: i32) -> (i32, i32, i32) {
    %c0_i32 = arith.constant 0 : i32
    %c0_i32_0 = arith.constant 0 : i32
    %c0_i32_1 = arith.constant 0 : i32
    return %c0_i32, %c0_i32_0, %arg0 : i32, i32, i32
  }
  func.func @transform_1(%arg0: i32) -> (i32, i32) {
    %c0_i32 = arith.constant 0 : i32
    %c0_i32_0 = arith.constant 0 : i32
    %c0_i32_1 = arith.constant 0 : i32
    return %c0_i32, %c0_i32_0 : i32, i32
  }
  func.func @transform_2(%arg0: i32) -> (i32, i32) {
    %c0_i32 = arith.constant 0 : i32
    %c0_i32_0 = arith.constant 0 : i32
    %c0_i32_1 = arith.constant 0 : i32
    return %c0_i32, %c0_i32_0 : i32, i32
  }
  func.func @transform_3(%arg0: i32) -> (i32, i32, i32) {
    %c0_i32 = arith.constant 0 : i32
    %c0_i32_0 = arith.constant 0 : i32
    %c0_i32_1 = arith.constant 0 : i32
    return %c0_i32, %c0_i32_0, %arg0 : i32, i32, i32
  }
}

</mosaic_0001>

<llo_original>
// kernel: tpu_custom_call.1
$region0: #{tpu_custom_call.1}
  #allocation0 [shape = 'u32[]', space=smem, size = 0x4, offset = 0x4, fixed_abs, tag = 'smem constant byte address 0x4 - core index']
  #allocation1 [shape = 'u32[144,128]{1,0:T(1,128)}', space=vmem, size = 0x12000, scoped, tag = 'internal scratch']
  %s0 = inlined_call_operand.hbm [shape: f32[2,256,256], index: 0, kind: input, shape index: {}]
  %s1 = inlined_call_operand.hbm [shape: f32[4,256], index: 1, kind: input, shape index: {}]
  %s2 = inlined_call_operand.vmem [shape: f32[4,2], index: 2, kind: input, shape index: {}]
  %s3 = inlined_call_operand.hbm [shape: f32[2,4,256], index: 3, kind: output, shape index: {}]
  %s4 = sld [smem:[#allocation0]]
  $region30: #{tpu_custom_call.1} parent=0
    _
  %s6 = ssub.s32 1, %s4
  %s7 = scalar_select 0, %s6, %s4
  $region1: #{tpu_custom_call.1} parent=0
    #allocation2 [shape = 'u8[524288]{0}', space=vmem, size = 0x80000, scoped, tag = 'input window, operand 0, single buffered']
    #allocation3 [shape = 's32[1]{0}', space=sflag, size = 0x4, scoped, tag = 'scoped memory for tpu_custom_call.1']
    #allocation4 [shape = 's32[1]{0}', space=sflag, size = 0x4, scoped, tag = 'scoped memory for tpu_custom_call.1']
    #allocation5 [shape = 'u8[4096]{0}', space=vmem, size = 0x1000, scoped, tag = 'input window, operand 1, single buffered']
    #allocation6 [shape = 's32[1]{0}', space=sflag, size = 0x4, scoped, tag = 'scoped memory for tpu_custom_call.1']
    #allocation7 [shape = 'u8[8192]{0}', space=vmem, size = 0x2000, scoped, tag = 'output window, operand 0, single buffered']
    %8 = vsyncpa [#allocation3], 0
    %9 = vsyncpa [#allocation6], 0
    %10 = vsyncpa [#allocation4], 0
    // Predicated region
    $region2: #{tpu_custom_call.1} parent=1 // pred_check
      _
    $region3: #{tpu_custom_call.1} parent=1 // pred_check_branch
      %12 = sbr.rel (0) target = $region5
    $region4: #{tpu_custom_call.1} parent=1 // pred_region
      %s14 = ssub.s32 16384, 16384
      %15 = vsyncadd [#allocation3], %s14
      %s16 = sshll.u32 [#allocation2], 4
      %s17 = int_to_ptr.vmem [resolvable:$true] %s16
      %22 = dma.hbm_to_vmem [thread:$0]  %s0, 16384, %s17, [#allocation3], 256, 256, 16
    $region5: #{tpu_custom_call.1} parent=1 // pred_fallthru
      _
    // Predicated region
    $region6: #{tpu_custom_call.1} parent=1 // pred_check
      _
    $region7: #{tpu_custom_call.1} parent=1 // pred_check_branch
      %24 = sbr.rel (0) target = $region9
    $region8: #{tpu_custom_call.1} parent=1 // pred_region
      %s26 = ssub.s32 128, 128
      %27 = vsyncadd [#allocation6], %s26
      %s29 = sshll.u32 [#allocation5], 4
      %s30 = int_to_ptr.vmem [resolvable:$true] %s29
      %32 = dma.hbm_to_vmem [thread:$0]  %s1, 128, %s30, [#allocation6]
    $region9: #{tpu_custom_call.1} parent=1 // pred_fallthru
      _
    // Predicated region
    $region10: #{tpu_custom_call.1} parent=1 // pred_check
      _
    $region11: #{tpu_custom_call.1} parent=1 // pred_check_branch
      %34 = sbr.rel (0) target = $region13
    $region12: #{tpu_custom_call.1} parent=1 // pred_region
      _
    $region13: #{tpu_custom_call.1} parent=1 // pred_fallthru
      _
    // Predicated region
    $region14: #{tpu_custom_call.1} parent=1 // pred_check
      _
    $region15: #{tpu_custom_call.1} parent=1 // pred_check_branch
      %36 = sbr.rel (0) target = $region17
    $region16: #{tpu_custom_call.1} parent=1 // pred_region
      %37 = dma.done [#allocation3], 16384
    $region17: #{tpu_custom_call.1} parent=1 // pred_fallthru
      _
    // Predicated region
    $region18: #{tpu_custom_call.1} parent=1 // pred_check
      _
    $region19: #{tpu_custom_call.1} parent=1 // pred_check_branch
      %39 = sbr.rel (0) target = $region21
    $region20: #{tpu_custom_call.1} parent=1 // pred_region
      %40 = dma.done [#allocation6], 128
    $region21: #{tpu_custom_call.1} parent=1 // pred_fallthru
      _
    %v41 = vld [vmem:[#allocation5] sm:$0xff]
    %v42 = vld [vmem:[%s2] sm:$0xf]
    %v43 = vld [vmem:[#allocation2] sm:$0xff]
    %v44 = vld [vmem:[#allocation2 + $0x8] sm:$0xff]
    %v45 = vld [vmem:[#allocation2 + $0x10] sm:$0xff]
    %v46 = vld [vmem:[#allocation2 + $0x18] sm:$0xff]
    %v47 = vld [vmem:[#allocation2 + $0x20] sm:$0xff]
    %v48 = vld [vmem:[#allocation2 + $0x28] sm:$0xff]
    %v49 = vld [vmem:[#allocation2 + $0x30] sm:$0xff]
    %v50 = vld [vmem:[#allocation2 + $0x38] sm:$0xff]
    %v51 = vld [vmem:[#allocation2 + $0x40] sm:$0xff]
    %v52 = vld [vmem:[#allocation2 + $0x48] sm:$0xff]
    %v53 = vld [vmem:[#allocation2 + $0x50] sm:$0xff]
    %v54 = vld [vmem:[#allocation2 + $0x58] sm:$0xff]
    %v55 = vld [vmem:[#allocation2 + $0x60] sm:$0xff]
    %v56 = vld [vmem:[#allocation2 + $0x68] sm:$0xff]
    %v57 = vld [vmem:[#allocation2 + $0x70] sm:$0xff]
    %v58 = vld [vmem:[#allocation2 + $0x78] sm:$0xff]
    %v59 = vld [vmem:[#allocation2 + $0x80] sm:$0xff]
    %v60 = vld [vmem:[#allocation2 + $0x88] sm:$0xff]
    %v61 = vld [vmem:[#allocation2 + $0x90] sm:$0xff]
    %v62 = vld [vmem:[#allocation2 + $0x98] sm:$0xff]
    %v63 = vld [vmem:[#allocation2 + $0xa0] sm:$0xff]
    %v64 = vld [vmem:[#allocation2 + $0xa8] sm:$0xff]
    %v65 = vld [vmem:[#allocation2 + $0xb0] sm:$0xff]
    %v66 = vld [vmem:[#allocation2 + $0xb8] sm:$0xff]
    %v67 = vld [vmem:[#allocation2 + $0xc0] sm:$0xff]
    %v68 = vld [vmem:[#allocation2 + $0xc8] sm:$0xff]
    %v69 = vld [vmem:[#allocation2 + $0xd0] sm:$0xff]
    %v70 = vld [vmem:[#allocation2 + $0xd8] sm:$0xff]
    %v71 = vld [vmem:[#allocation2 + $0xe0] sm:$0xff]
    %v72 = vld [vmem:[#allocation2 + $0xe8] sm:$0xff]
    %v73 = vld [vmem:[#allocation2 + $0xf0] sm:$0xff]
    %v74 = vld [vmem:[#allocation2 + $0xf8] sm:$0xff]
    %v75 = vld [vmem:[#allocation2 + $0x100] sm:$0xff]
    %v76 = vld [vmem:[#allocation2 + $0x108] sm:$0xff]
    %v77 = vld [vmem:[#allocation2 + $0x110] sm:$0xff]
    %v78 = vld [vmem:[#allocation2 + $0x118] sm:$0xff]
    %v79 = vld [vmem:[#allocation2 + $0x120] sm:$0xff]
    %v80 = vld [vmem:[#allocation2 + $0x128] sm:$0xff]
    %v81 = vld [vmem:[#allocation2 + $0x130] sm:$0xff]
    %v82 = vld [vmem:[#allocation2 + $0x138] sm:$0xff]
    %v83 = vld [vmem:[#allocation2 + $0x140] sm:$0xff]
    %v84 = vld [vmem:[#allocation2 + $0x148] sm:$0xff]
    %v85 = vld [vmem:[#allocation2 + $0x150] sm:$0xff]
    %v86 = vld [vmem:[#allocation2 + $0x158] sm:$0xff]
    %v87 = vld [vmem:[#allocation2 + $0x160] sm:$0xff]
    %v88 = vld [vmem:[#allocation2 + $0x168] sm:$0xff]
    %v89 = vld [vmem:[#allocation2 + $0x170] sm:$0xff]
    %v90 = vld [vmem:[#allocation2 + $0x178] sm:$0xff]
    %v91 = vld [vmem:[#allocation2 + $0x180] sm:$0xff]
    %v92 = vld [vmem:[#allocation2 + $0x188] sm:$0xff]
    %v93 = vld [vmem:[#allocation2 + $0x190] sm:$0xff]
    %v94 = vld [vmem:[#allocation2 + $0x198] sm:$0xff]
    %v95 = vld [vmem:[#allocation2 + $0x1a0] sm:$0xff]
    %v96 = vld [vmem:[#allocation2 + $0x1a8] sm:$0xff]
    %v97 = vld [vmem:[#allocation2 + $0x1b0] sm:$0xff]
    %v98 = vld [vmem:[#allocation2 + $0x1b8] sm:$0xff]
    %v99 = vld [vmem:[#allocation2 + $0x1c0] sm:$0xff]
    %v100 = vld [vmem:[#allocation2 + $0x1c8] sm:$0xff]
    %v101 = vld [vmem:[#allocation2 + $0x1d0] sm:$0xff]
    %v102 = vld [vmem:[#allocation2 + $0x1d8] sm:$0xff]
    %v103 = vld [vmem:[#allocation2 + $0x1e0] sm:$0xff]
    %v104 = vld [vmem:[#allocation2 + $0x1e8] sm:$0xff]
    %v105 = vld [vmem:[#allocation2 + $0x1f0] sm:$0xff]
    %v106 = vld [vmem:[#allocation2 + $0x1f8] sm:$0xff]
    %v108 = vcombine.high %v41, %v41
    %110 = vmatprep.subr.mxu0 %v74
    %111 = vmatpush1.msra.mxu0 %v73
    %112 = vmatprep.subr.mxu0 %v72
    %113 = vmatpush1.msra.mxu0 %v71
    %114 = vmatprep.subr.mxu0 %v70
    %115 = vmatpush1.msra.mxu0 %v69
    %116 = vmatprep.subr.mxu0 %v68
    %117 = vmatpush1.msra.mxu0 %v67
    %118 = vmatprep.subr.mxu0 %v66
    %119 = vmatpush1.msra.mxu0 %v65
    %120 = vmatprep.subr.mxu0 %v64
    %121 = vmatpush1.msra.mxu0 %v63
    %122 = vmatprep.subr.mxu0 %v62
    %123 = vmatpush1.msra.mxu0 %v61
    %124 = vmatprep.subr.mxu0 %v60
    %125 = vmatpush1.msra.mxu0 %v59
    %126 = vmatprep.subr.mxu0 %v58
    %127 = vmatpush1.msra.mxu0 %v57
    %128 = vmatprep.subr.mxu0 %v56
    %129 = vmatpush1.msra.mxu0 %v55
    %130 = vmatprep.subr.mxu0 %v54
    %131 = vmatpush1.msra.mxu0 %v53
    %132 = vmatprep.subr.mxu0 %v52
    %133 = vmatpush1.msra.mxu0 %v51
    %134 = vmatprep.subr.mxu0 %v50
    %135 = vmatpush1.msra.mxu0 %v49
    %136 = vmatprep.subr.mxu0 %v48
    %137 = vmatpush1.msra.mxu0 %v47
    %138 = vmatprep.subr.mxu0 %v46
    %139 = vmatpush1.msra.mxu0 %v45
    %140 = vmatprep.subr.mxu0 %v44
    %141 = vmatpush1.msra.mxu0 %v43
    %142 = vmatprep.subr.mxu0 %v106
    %143 = vmatpush2.msra.mxu0 %v105
    %144 = vmatprep.subr.mxu0 %v104
    %145 = vmatpush2.msra.mxu0 %v103
    %146 = vmatprep.subr.mxu0 %v102
    %147 = vmatpush2.msra.mxu0 %v101
    %148 = vmatprep.subr.mxu0 %v100
    %149 = vmatpush2.msra.mxu0 %v99
    %150 = vmatprep.subr.mxu0 %v98
    %151 = vmatpush2.msra.mxu0 %v97
    %152 = vmatprep.subr.mxu0 %v96
    %153 = vmatpush2.msra.mxu0 %v95
    %154 = vmatprep.subr.mxu0 %v94
    %155 = vmatpush2.msra.mxu0 %v93
    %156 = vmatprep.subr.mxu0 %v92
    %157 = vmatpush2.msra.mxu0 %v91
    %158 = vmatprep.subr.mxu0 %v90
    %159 = vmatpush2.msra.mxu0 %v89
    %160 = vmatprep.subr.mxu0 %v88
    %161 = vmatpush2.msra.mxu0 %v87
    %162 = vmatprep.subr.mxu0 %v86
    %163 = vmatpush2.msra.mxu0 %v85
    %164 = vmatprep.subr.mxu0 %v84
    %165 = vmatpush2.msra.mxu0 %v83
    %166 = vmatprep.subr.mxu0 %v82
    %167 = vmatpush2.msra.mxu0 %v81
    %168 = vmatprep.subr.mxu0 %v80
    %169 = vmatpush2.msra.mxu0 %v79
    %170 = vmatprep.subr.mxu0 %v78
    %171 = vmatpush2.msra.mxu0 %v77
    %172 = vmatprep.subr.mxu0 %v76
    %173 = vmatpush2.msra.mxu0 %v75
    %174 = vmatprep.mubr.f32.mxu0 %v108
    %175 = vmatmul.mubr.f32.gmra.mxu0 %v41
    %v176 = vpop.f32.mrf.mxu0
    %v177 = vadd.f32 0.0, %v176
    %v178 = vpop.f32.mrf.mxu0
    %v179 = vadd.f32 0.0, %v178
    %180 = vdwg.mxu0
    %182 = vset.pattern.permute.xlu0 0
    %183 = vperm.xlu0 %182, %v42
    %v184 = vpop.permute.xlu0 %183
    %v186 = vmul.f32 %v177, %v184
    %v187 = vmul.f32 %v179, %v184
    %188 = vset.pattern.permute.xlu0 1
    %189 = vperm.xlu0 %188, %v42
    %v190 = vpop.permute.xlu0 %189
    %v192 = vadd.f32 %v186, %v190
    %v193 = vadd.f32 %v187, %v190
    %v194 = vmul.f32 %v192, 1.442695
    %v195 = vpow.pop %v194
    %v196 = vmul.f32 %v193, 1.442695
    %v197 = vpow.pop %v196
    %v200 = vcombine.low %v195, %v197
    %202 = vst [vmem:[#allocation7] sm:$0xff] %v200
    %s203 = scalar_lea.vmem [#allocation2], 512
    %v204 = vld [vmem:[%s203] sm:$0xff]
    %v205 = vld [vmem:[%s203 + $0x8] sm:$0xff]
    %v206 = vld [vmem:[%s203 + $0x10] sm:$0xff]
    %v207 = vld [vmem:[%s203 + $0x18] sm:$0xff]
    %v208 = vld [vmem:[%s203 + $0x20] sm:$0xff]
    %v209 = vld [vmem:[%s203 + $0x28] sm:$0xff]
    %v210 = vld [vmem:[%s203 + $0x30] sm:$0xff]
    %v211 = vld [vmem:[%s203 + $0x38] sm:$0xff]
    %v212 = vld [vmem:[%s203 + $0x40] sm:$0xff]
    %v213 = vld [vmem:[%s203 + $0x48] sm:$0xff]
    %v214 = vld [vmem:[%s203 + $0x50] sm:$0xff]
    %v215 = vld [vmem:[%s203 + $0x58] sm:$0xff]
    %v216 = vld [vmem:[%s203 + $0x60] sm:$0xff]
    %v217 = vld [vmem:[%s203 + $0x68] sm:$0xff]
    %v218 = vld [vmem:[%s203 + $0x70] sm:$0xff]
    %v219 = vld [vmem:[%s203 + $0x78] sm:$0xff]
    %v220 = vld [vmem:[%s203 + $0x80] sm:$0xff]
    %v221 = vld [vmem:[%s203 + $0x88] sm:$0xff]
    %v222 = vld [vmem:[%s203 + $0x90] sm:$0xff]
    %v223 = vld [vmem:[%s203 + $0x98] sm:$0xff]
    %v224 = vld [vmem:[%s203 + $0xa0] sm:$0xff]
    %v225 = vld [vmem:[%s203 + $0xa8] sm:$0xff]
    %v226 = vld [vmem:[%s203 + $0xb0] sm:$0xff]
    %v227 = vld [vmem:[%s203 + $0xb8] sm:$0xff]
    %v228 = vld [vmem:[%s203 + $0xc0] sm:$0xff]
    %v229 = vld [vmem:[%s203 + $0xc8] sm:$0xff]
    %v230 = vld [vmem:[%s203 + $0xd0] sm:$0xff]
    %v231 = vld [vmem:[%s203 + $0xd8] sm:$0xff]
    %v232 = vld [vmem:[%s203 + $0xe0] sm:$0xff]
    %v233 = vld [vmem:[%s203 + $0xe8] sm:$0xff]
    %v234 = vld [vmem:[%s203 + $0xf0] sm:$0xff]
    %v235 = vld [vmem:[%s203 + $0xf8] sm:$0xff]
    %v236 = vld [vmem:[%s203 + $0x100] sm:$0xff]
    %v237 = vld [vmem:[%s203 + $0x108] sm:$0xff]
    %v238 = vld [vmem:[%s203 + $0x110] sm:$0xff]
    %v239 = vld [vmem:[%s203 + $0x118] sm:$0xff]
    %v240 = vld [vmem:[%s203 + $0x120] sm:$0xff]
    %v241 = vld [vmem:[%s203 + $0x128] sm:$0xff]
    %v242 = vld [vmem:[%s203 + $0x130] sm:$0xff]
    %v243 = vld [vmem:[%s203 + $0x138] sm:$0xff]
    %v244 = vld [vmem:[%s203 + $0x140] sm:$0xff]
    %v245 = vld [vmem:[%s203 + $0x148] sm:$0xff]
    %v246 = vld [vmem:[%s203 + $0x150] sm:$0xff]
    %v247 = vld [vmem:[%s203 + $0x158] sm:$0xff]
    %v248 = vld [vmem:[%s203 + $0x160] sm:$0xff]
    %v249 = vld [vmem:[%s203 + $0x168] sm:$0xff]
    %v250 = vld [vmem:[%s203 + $0x170] sm:$0xff]
    %v251 = vld [vmem:[%s203 + $0x178] sm:$0xff]
    %v252 = vld [vmem:[%s203 + $0x180] sm:$0xff]
    %v253 = vld [vmem:[%s203 + $0x188] sm:$0xff]
    %v254 = vld [vmem:[%s203 + $0x190] sm:$0xff]
    %v255 = vld [vmem:[%s203 + $0x198] sm:$0xff]
    %v256 = vld [vmem:[%s203 + $0x1a0] sm:$0xff]
    %v257 = vld [vmem:[%s203 + $0x1a8] sm:$0xff]
    %v258 = vld [vmem:[%s203 + $0x1b0] sm:$0xff]
    %v259 = vld [vmem:[%s203 + $0x1b8] sm:$0xff]
    %v260 = vld [vmem:[%s203 + $0x1c0] sm:$0xff]
    %v261 = vld [vmem:[%s203 + $0x1c8] sm:$0xff]
    %v262 = vld [vmem:[%s203 + $0x1d0] sm:$0xff]
    %v263 = vld [vmem:[%s203 + $0x1d8] sm:$0xff]
    %v264 = vld [vmem:[%s203 + $0x1e0] sm:$0xff]
    %v265 = vld [vmem:[%s203 + $0x1e8] sm:$0xff]
    %v266 = vld [vmem:[%s203 + $0x1f0] sm:$0xff]
    %v267 = vld [vmem:[%s203 + $0x1f8] sm:$0xff]
    %268 = vmatprep.subr.mxu0 %v235
    %269 = vmatpush1.msra.mxu0 %v234
    %270 = vmatprep.subr.mxu0 %v233
    %271 = vmatpush1.msra.mxu0 %v232
    %272 = vmatprep.subr.mxu0 %v231
    %273 = vmatpush1.msra.mxu0 %v230
    %274 = vmatprep.subr.mxu0 %v229
    %275 = vmatpush1.msra.mxu0 %v228
    %276 = vmatprep.subr.mxu0 %v227
    %277 = vmatpush1.msra.mxu0 %v226
    %278 = vmatprep.subr.mxu0 %v225
    %279 = vmatpush1.msra.mxu0 %v224
    %280 = vmatprep.subr.mxu0 %v223
    %281 = vmatpush1.msra.mxu0 %v222
    %282 = vmatprep.subr.mxu0 %v221
    %283 = vmatpush1.msra.mxu0 %v220
    %284 = vmatprep.subr.mxu0 %v219
    %285 = vmatpush1.msra.mxu0 %v218
    %286 = vmatprep.subr.mxu0 %v217
    %287 = vmatpush1.msra.mxu0 %v216
    %288 = vmatprep.subr.mxu0 %v215
    %289 = vmatpush1.msra.mxu0 %v214
    %290 = vmatprep.subr.mxu0 %v213
    %291 = vmatpush1.msra.mxu0 %v212
    %292 = vmatprep.subr.mxu0 %v211
    %293 = vmatpush1.msra.mxu0 %v210
    %294 = vmatprep.subr.mxu0 %v209
    %295 = vmatpush1.msra.mxu0 %v208
    %296 = vmatprep.subr.mxu0 %v207
    %297 = vmatpush1.msra.mxu0 %v206
    %298 = vmatprep.subr.mxu0 %v205
    %299 = vmatpush1.msra.mxu0 %v204
    %300 = vmatprep.subr.mxu0 %v267
    %301 = vmatpush2.msra.mxu0 %v266
    %302 = vmatprep.subr.mxu0 %v265
    %303 = vmatpush2.msra.mxu0 %v264
    %304 = vmatprep.subr.mxu0 %v263
    %305 = vmatpush2.msra.mxu0 %v262
    %306 = vmatprep.subr.mxu0 %v261
    %307 = vmatpush2.msra.mxu0 %v260
    %308 = vmatprep.subr.mxu0 %v259
    %309 = vmatpush2.msra.mxu0 %v258
    %310 = vmatprep.subr.mxu0 %v257
    %311 = vmatpush2.msra.mxu0 %v256
    %312 = vmatprep.subr.mxu0 %v255
    %313 = vmatpush2.msra.mxu0 %v254
    %314 = vmatprep.subr.mxu0 %v253
    %315 = vmatpush2.msra.mxu0 %v252
    %316 = vmatprep.subr.mxu0 %v251
    %317 = vmatpush2.msra.mxu0 %v250
    %318 = vmatprep.subr.mxu0 %v249
    %319 = vmatpush2.msra.mxu0 %v248
    %320 = vmatprep.subr.mxu0 %v247
    %321 = vmatpush2.msra.mxu0 %v246
    %322 = vmatprep.subr.mxu0 %v245
    %323 = vmatpush2.msra.mxu0 %v244
    %324 = vmatprep.subr.mxu0 %v243
    %325 = vmatpush2.msra.mxu0 %v242
    %326 = vmatprep.subr.mxu0 %v241
    %327 = vmatpush2.msra.mxu0 %v240
    %328 = vmatprep.subr.mxu0 %v239
    %329 = vmatpush2.msra.mxu0 %v238
    %330 = vmatprep.subr.mxu0 %v237
    %331 = vmatpush2.msra.mxu0 %v236
    %332 = vmatprep.mubr.f32.mxu0 %v108
    %333 = vmatmul.mubr.f32.gmra.mxu0 %v41
    %v334 = vpop.f32.mrf.mxu0
    %v335 = vadd.f32 0.0, %v334
    %v336 = vpop.f32.mrf.mxu0
    %v337 = vadd.f32 0.0, %v336
    %338 = vdwg.mxu0
    %v339 = vmul.f32 %v335, %v184
    %v340 = vmul.f32 %v337, %v184
    %v341 = vadd.f32 %v339, %v190
    %v342 = vadd.f32 %v340, %v190
    %v343 = vmul.f32 %v341, 1.442695
    %v344 = vpow.pop %v343
    %v345 = vmul.f32 %v342, 1.442695
    %v346 = vpow.pop %v345
    %v349 = vcombine.low %v344, %v346
    %s351 = scalar_lea.vmem [#allocation7], 8
    %352 = vst [vmem:[%s351] sm:$0xff] %v349
    // Predicated region
    $region22: #{tpu_custom_call.1} parent=1 // pred_check
      _
    $region23: #{tpu_custom_call.1} parent=1 // pred_check_branch
      %354 = sbr.rel (0) target = $region25
    $region24: #{tpu_custom_call.1} parent=1 // pred_region
      %s356 = ssub.s32 256, 256
      %357 = vsyncadd [#allocation4], %s356
      %s358 = sshll.u32 [#allocation7], 4
      %s359 = int_to_ptr.vmem [resolvable:$true] %s358
      %364 = dma.vmem_to_hbm [thread:$0]  %s359, 256, %s3, [#allocation4], 128, 128, 8
    $region25: #{tpu_custom_call.1} parent=1 // pred_fallthru
      _
    // Predicated region
    $region26: #{tpu_custom_call.1} parent=1 // pred_check
      _
    $region27: #{tpu_custom_call.1} parent=1 // pred_check_branch
      %366 = sbr.rel (0) target = $region29
    $region28: #{tpu_custom_call.1} parent=1 // pred_region
      %367 = dma.done [#allocation4], 256
    $region29: #{tpu_custom_call.1} parent=1 // pred_fallthru
      _
    %368 = vsyncpa [#allocation3], 1
    %369 = vsyncpa [#allocation6], 1
    %370 = vsyncpa [#allocation4], 1

</llo_original>
